<compile_context>
chip_gen: v6e
topology: v6e:2x2x1
jax: 0.10.0
libtpu: 0.0.40
codegen_flags: <defaults>
</compile_context>

<pallas_src>
import jax
import jax.numpy as jnp
from jax.experimental import pallas as pl
from jax.experimental.pallas import tpu as pltpu


def _shrinkage_kernel(lamda_ref, x_ref, o_ref):
    # lamda_ref: (1, 1) scalar in SMEM; x_ref/o_ref: (tile_rows, 128) VMEM tiles.
    lam = lamda_ref[0, 0]
    x = x_ref[...]
    # soft-threshold via clip: identical to sign(x)*max(0,|x|-lam) for lam >= 0
    o_ref[...] = x - jnp.clip(x, -lam, lam)


# minimum sublane packing per element size (bytes -> sublanes)
_SUBLANES_BY_ITEMSIZE = {1: 32, 2: 16, 4: 8, 8: 8}

_LANES = 128


def shrinkage_activation(x, lamda, *, tile_rows=4096, min_pallas_elems=1 << 16):
    """Elementwise soft-threshold. x: any shape, lamda: python/jnp scalar >= 0."""
    orig_shape = x.shape
    dtype = x.dtype
    n = x.size

    # Tiny inputs: the pallas_call launch/pipeline-prime cost dominates; let
    # XLA fuse the elementwise expression instead.
    if n < min_pallas_elems:
        return x - jnp.clip(x, -lamda, lamda)

    sub = _SUBLANES_BY_ITEMSIZE.get(jnp.dtype(dtype).itemsize, 8)
    quantum = sub * _LANES  # pad only to the native packing tile, not the block

    flat = x.reshape(-1)
    n_pad = ((n + quantum - 1) // quantum) * quantum
    padded = n_pad != n
    if padded:
        flat = jnp.concatenate([flat, jnp.zeros((n_pad - n,), dtype=dtype)])

    rows = n_pad // _LANES  # multiple of `sub` by construction
    x2d = flat.reshape(rows, _LANES)

    # dtype-aware tile: multiple of the sublane quantum, clamped to the array.
    tr = max(sub, ((tile_rows + sub - 1) // sub) * sub)
    tr = min(tr, rows)

    lam_arr = jnp.asarray(lamda, dtype=dtype).reshape(1, 1)

    grid = (pl.cdiv(rows, tr),)

    out2d = pl.pallas_call(
        _shrinkage_kernel,
        out_shape=jax.ShapeDtypeStruct((rows, _LANES), dtype),
        grid_spec=pltpu.PrefetchScalarGridSpec(
            num_scalar_prefetch=0,
            grid=grid,
            in_specs=[
                pl.BlockSpec(memory_space=pltpu.SMEM),              # lamda scalar
                pl.BlockSpec((tr, _LANES), lambda i: (i, 0)),       # x tile
            ],
            out_specs=pl.BlockSpec((tr, _LANES), lambda i: (i, 0)),
        ),
        compiler_params=pltpu.CompilerParams(
            dimension_semantics=("parallel",),  # megacore/TC sharding on v7x
        ),
    )(lam_arr, x2d)

    if padded:
        return out2d.reshape(-1)[:n].reshape(orig_shape)
    return out2d.reshape(orig_shape)


def _reference(x, lamda):
    return jnp.sign(x) * jnp.maximum(jnp.zeros_like(x), jnp.abs(x) - lamda)


if __name__ == "__main__":
    key = jax.random.PRNGKey(0)
    lamda = 0.0001  # default --lamda from the argparse config

    # 1) Module-scale NCHW input (batch=2, channels=4, spatial=16x16).
    #    Force the Pallas path (min_pallas_elems=0) so the kernel is exercised.
    x_small = jax.random.normal(key, (2, 4, 16, 16), dtype=jnp.float32)
    y_small = shrinkage_activation(x_small, lamda, min_pallas_elems=0)
    y_small = jax.block_until_ready(y_small)
    assert y_small.shape == x_small.shape and y_small.dtype == x_small.dtype
    assert jnp.allclose(y_small, _reference(x_small, lamda), atol=1e-6)

    # 2) Larger f32 input that naturally takes the big-tile Pallas path
    #    (no padding, multi-block grid of (4096,128) tiles).
    k1, k2 = jax.random.split(key)
    x_big = jax.random.normal(k1, (8, 32, 64, 64), dtype=jnp.float32)
    y_big = shrinkage_activation(x_big, lamda)
    y_big = jax.block_until_ready(y_big)
    assert y_big.shape == x_big.shape and y_big.dtype == x_big.dtype
    assert jnp.allclose(y_big, _reference(x_big, lamda), atol=1e-6)

    # 3) bfloat16 coverage (dtype-aware 16-sublane packing quantum).
    x_bf16 = jax.random.normal(k2, (8, 32, 64, 64), dtype=jnp.bfloat16)
    y_bf16 = shrinkage_activation(x_bf16, lamda)
    y_bf16 = jax.block_until_ready(y_bf16)
    assert y_bf16.shape == x_bf16.shape and y_bf16.dtype == x_bf16.dtype
    assert jnp.allclose(
        y_bf16.astype(jnp.float32),
        _reference(x_bf16, jnp.bfloat16(lamda)).astype(jnp.float32),
        atol=1e-2,
    )

    # 4) Non-aligned size -> exercises the padding/tail-slice path.
    x_odd = jax.random.normal(k2, (3, 784), dtype=jnp.float32)  # 2352 elems
    y_odd = shrinkage_activation(x_odd, lamda, min_pallas_elems=0)
    y_odd = jax.block_until_ready(y_odd)
    assert y_odd.shape == x_odd.shape
    assert jnp.allclose(y_odd, _reference(x_odd, lamda), atol=1e-6)

    print("KERNEL_OK")
</pallas_src>

<mosaic_0001>
module attributes {stable_mosaic.version = 11 : i64} {
  func.func @_shrinkage_kernel(%arg0: i32, %arg1: memref<1x1xf32, #tpu.memory_space<smem>>, %arg2: memref<16x128xf32, #tpu.memory_space<vmem>>, %arg3: memref<16x128xf32, #tpu.memory_space<vmem>>) attributes {dimension_semantics = [#tpu.dimension_semantics<parallel>], iteration_bounds = array<i64: 1>, scalar_prefetch = 0 : i64, scratch_operands = 0 : i64, tpu.core_type = #tpu.core_type<tc>, window_params = [{transform_indices = @transform_0, window_bounds = array<i64: 1, 1>}, {transform_indices = @transform_1, window_bounds = array<i64: 16, 128>}, {transform_indices = @transform_2, window_bounds = array<i64: 16, 128>}]} {
    %c0 = arith.constant 0 : index
    %c0_0 = arith.constant 0 : index
    %0 = memref.load %arg1[%c0, %c0_0] : memref<1x1xf32, #tpu.memory_space<smem>>
    %c0_1 = arith.constant 0 : index
    %c0_2 = arith.constant 0 : index
    %1 = vector.load %arg2[%c0_1, %c0_2] : memref<16x128xf32, #tpu.memory_space<vmem>>, vector<16x128xf32>
    %cst = arith.constant 0.000000e+00 : f32
    %2 = arith.subf %cst, %0 : f32
    %3 = vector.broadcast %2 : f32 to vector<16x128xf32>
    %4 = arith.maximumf %3, %1 : vector<16x128xf32>
    %5 = vector.broadcast %0 : f32 to vector<16x128xf32>
    %6 = arith.minimumf %5, %4 : vector<16x128xf32>
    %7 = arith.subf %1, %6 : vector<16x128xf32>
    %c0_3 = arith.constant 0 : index
    %c0_4 = arith.constant 0 : index
    %8 = vector.load %arg3[%c0_3, %c0_4] : memref<16x128xf32, #tpu.memory_space<vmem>>, vector<16x128xf32>
    tpu.vector_store %arg3[%c0_3, %c0_4], %7 {strides = array<i32>} : memref<16x128xf32, #tpu.memory_space<vmem>>, vector<16x128xf32>,
    return
  }
  func.func @transform_0(%arg0: i32) -> (i32, i32) {
    %c0_i32 = arith.constant 0 : i32
    %c0_i32_0 = arith.constant 0 : i32
    %c0_i32_1 = arith.constant 0 : i32
    return %c0_i32, %c0_i32_0 : i32, i32
  }
  func.func @transform_1(%arg0: i32) -> (i32, i32) {
    %c0_i32 = arith.constant 0 : i32
    %c0_i32_0 = arith.constant 0 : i32
    return %arg0, %c0_i32 : i32, i32
  }
  func.func @transform_2(%arg0: i32) -> (i32, i32) {
    %c0_i32 = arith.constant 0 : i32
    %c0_i32_0 = arith.constant 0 : i32
    return %arg0, %c0_i32 : i32, i32
  }
}

</mosaic_0001>

<llo_original>
// kernel: tpu_custom_call.1
$region0: #{tpu_custom_call.1}
  #allocation0 [shape = 'u32[]', space=smem, size = 0x4, offset = 0x4, fixed_abs, tag = 'smem constant byte address 0x4 - core index']
  #allocation1 [shape = 'u32[144,128]{1,0:T(1,128)}', space=vmem, size = 0x12000, scoped, tag = 'internal scratch']
  #allocation2 [shape = 'f32[1,1]{1,0:T(1,128)S(6)}', space=smem, size = 0x200, scoped, tag = 'scoped memory for tpu_custom_call.1']
  %s0 = inlined_call_operand.<no memory space> [shape: f32[1,1], index: 0, kind: input, shape index: {}]
  %s1 = inlined_call_operand.hbm [shape: f32[16,128], index: 1, kind: input, shape index: {}]
  %s2 = inlined_call_operand.hbm [shape: f32[16,128], index: 2, kind: output, shape index: {}]
  %s3 = sld [smem:[#allocation0]]
  $region22: #{tpu_custom_call.1} parent=0
    _
  %s5 = ssub.s32 1, %s3
  %s6 = scalar_select 0, %s5, %s3
  %7 = sst [smem:[#allocation2]] %s0
  $region1: #{tpu_custom_call.1} parent=0
    #allocation3 [shape = 'u8[8192]{0}', space=vmem, size = 0x2000, scoped, tag = 'input window, operand 1, single buffered']
    #allocation4 [shape = 's32[1]{0}', space=sflag, size = 0x4, scoped, tag = 'scoped memory for tpu_custom_call.1']
    #allocation5 [shape = 's32[1]{0}', space=sflag, size = 0x4, scoped, tag = 'scoped memory for tpu_custom_call.1']
    #allocation6 [shape = 'u8[8192]{0}', space=vmem, size = 0x2000, scoped, tag = 'output window, operand 0, single buffered']
    %8 = vsyncpa [#allocation4], 0
    %9 = vsyncpa [#allocation5], 0
    // Predicated region
    $region2: #{tpu_custom_call.1} parent=1 // pred_check
      _
    $region3: #{tpu_custom_call.1} parent=1 // pred_check_branch
      %11 = sbr.rel (0) target = $region5
    $region4: #{tpu_custom_call.1} parent=1 // pred_region
      _
    $region5: #{tpu_custom_call.1} parent=1 // pred_fallthru
      _
    // Predicated region
    $region6: #{tpu_custom_call.1} parent=1 // pred_check
      _
    $region7: #{tpu_custom_call.1} parent=1 // pred_check_branch
      %13 = sbr.rel (0) target = $region9
    $region8: #{tpu_custom_call.1} parent=1 // pred_region
      %s15 = ssub.s32 256, 256
      %16 = vsyncadd [#allocation4], %s15
      %s17 = sshll.u32 [#allocation3], 4
      %s18 = int_to_ptr.vmem [resolvable:$true] %s17
      %23 = dma.hbm_to_vmem [thread:$0]  %s1, 256, %s18, [#allocation4], 128, 128, 8
    $region9: #{tpu_custom_call.1} parent=1 // pred_fallthru
      _
    // Predicated region
    $region10: #{tpu_custom_call.1} parent=1 // pred_check
      _
    $region11: #{tpu_custom_call.1} parent=1 // pred_check_branch
      %25 = sbr.rel (0) target = $region13
    $region12: #{tpu_custom_call.1} parent=1 // pred_region
      %26 = dma.done [#allocation4], 256
    $region13: #{tpu_custom_call.1} parent=1 // pred_fallthru
      _
    %s27 = sld [smem:[#allocation2]]
    %v28 = vld [vmem:[#allocation3] sm:$0xff]
    %v29 = vld [vmem:[#allocation3 + $0x8] sm:$0xff]
    %s30 = ssub.f32 0.0, %s27
    %v31 = vstv %s30
    %v32 = vmax.f32 %v31, %v28
    %v33 = vmax.f32 %v31, %v29
    %v34 = vstv %s27
    %v35 = vmin.f32 %v34, %v32
    %v36 = vmin.f32 %v34, %v33
    %v37 = vsub.f32 %v28, %v35
    %v38 = vsub.f32 %v29, %v36
    %39 = vst [vmem:[#allocation6] sm:$0xff] %v37
    %40 = vst [vmem:[#allocation6 + $0x8] sm:$0xff] %v38
    // Predicated region
    $region14: #{tpu_custom_call.1} parent=1 // pred_check
      _
    $region15: #{tpu_custom_call.1} parent=1 // pred_check_branch
      %42 = sbr.rel (0) target = $region17
    $region16: #{tpu_custom_call.1} parent=1 // pred_region
      %s44 = ssub.s32 256, 256
      %45 = vsyncadd [#allocation5], %s44
      %s46 = sshll.u32 [#allocation6], 4
      %s47 = int_to_ptr.vmem [resolvable:$true] %s46
      %52 = dma.vmem_to_hbm [thread:$0]  %s47, 256, %s2, [#allocation5], 128, 128, 8
    $region17: #{tpu_custom_call.1} parent=1 // pred_fallthru
      _
    // Predicated region
    $region18: #{tpu_custom_call.1} parent=1 // pred_check
      _
    $region19: #{tpu_custom_call.1} parent=1 // pred_check_branch
      %54 = sbr.rel (0) target = $region21
    $region20: #{tpu_custom_call.1} parent=1 // pred_region
      %55 = dma.done [#allocation5], 256
    $region21: #{tpu_custom_call.1} parent=1 // pred_fallthru
      _
    %56 = vsyncpa [#allocation4], 1
    %57 = vsyncpa [#allocation5], 1

</llo_original>
